<compile_context>
chip_gen: v7x
topology: tpu7x:2x2x1
jax: 0.10.0
libtpu: 0.0.40
codegen_flags: <defaults>
</compile_context>

<pallas_src>
import jax
import jax.numpy as jnp
from jax import lax
from jax.experimental import pallas as pl
from jax.experimental.pallas import tpu as pltpu

_LANE = 128
_SUBLANE = 8
_SLAB_ROWS = 256  # rows per inner reduction step (32 f32 vregs per temporary)


def _make_content_loss_kernel(tile_rows, slab_rows, rows, num_blocks, need_mask):
    num_slabs = tile_rows // slab_rows

    def kernel(x_ref, t_ref, part_ref):
        i = pl.program_id(0)

        def slab_sum(s, masked):
            start = s * slab_rows
            if not isinstance(start, int):
                start = pl.multiple_of(start, slab_rows)
            xs = x_ref[pl.ds(start, slab_rows), :].astype(jnp.float32)
            ts = t_ref[pl.ds(start, slab_rows), :].astype(jnp.float32)
            d = xs - ts
            sq = d * d
            if masked:
                local = lax.broadcasted_iota(jnp.int32, (slab_rows, _LANE), 0)
                global_row = i * tile_rows + s * slab_rows + local
                sq = jnp.where(global_row < rows, sq, jnp.float32(0.0))
            # (slab_rows,128) -> (slab_rows//8, 8, 128) is layout-aligned; the
            # sum over the leading axis is pure VPU vreg adds (no XLU).
            return jnp.sum(
                sq.reshape(slab_rows // _SUBLANE, _SUBLANE, _LANE), axis=0
            )

        def block_sum(masked):
            acc = slab_sum(0, masked)
            if num_slabs == 1:
                return acc

            def body(s, a):
                return a + slab_sum(s, masked)

            if num_slabs <= 8:
                return lax.fori_loop(1, num_slabs, body, acc, unroll=True)
            return lax.fori_loop(1, num_slabs, body, acc)

        if not need_mask:
            part_ref[0, :, :] = block_sum(False)
        elif num_blocks == 1:
            part_ref[0, :, :] = block_sum(True)
        else:
            # Only the final (partial) block pays for the mask.
            @pl.when(i == num_blocks - 1)
            def _():
                part_ref[0, :, :] = block_sum(True)

            @pl.when(i != num_blocks - 1)
            def _():
                part_ref[0, :, :] = block_sum(False)

    return kernel


def content_loss(x, target, *, max_tile_rows=8192):
    """ContentLoss forward: returns (input_passthrough, mse_loss_scalar)."""
    assert x.shape == target.shape, (x.shape, target.shape)
    total = int(x.size)
    if total == 0:
        return x, jnp.float32(0.0)

    itemsize = jnp.dtype(x.dtype).itemsize
    # Sublane pack for the input dtype: 8 rows (4-byte), 16 (2-byte), 32 (1-byte).
    pack = max(_SUBLANE, 32 // max(itemsize, 1))
    chunk = pack * _LANE

    xf = x.reshape(-1)
    tf = target.reshape(-1)
    padded_total = -(-total // chunk) * chunk
    if padded_total != total:
        # Ragged sizes only: zero-pad both operands (pad contributes 0 to the
        # squared-difference sum).  Aligned inputs stream with no extra copy.
        # TODO(synk): a fully pad-free ragged path needs 1D blocks + element mask.
        pad = padded_total - total
        xf = jnp.pad(xf, (0, pad))
        tf = jnp.pad(tf, (0, pad))
    rows = padded_total // _LANE  # multiple of `pack`
    x2 = xf.reshape(rows, _LANE)
    t2 = tf.reshape(rows, _LANE)

    # Tile sizing: largest lane-dense tile <= max_tile_rows, multiple of the
    # dtype sublane pack and of the slab size.
    tile_rows = min(int(max_tile_rows), rows)
    tile_rows = max(tile_rows - tile_rows % pack, pack)
    slab_rows = min(_SLAB_ROWS, tile_rows)
    if tile_rows % slab_rows:
        tile_rows -= tile_rows % slab_rows
    num_blocks = pl.cdiv(rows, tile_rows)
    need_mask = (rows % tile_rows) != 0

    kernel = _make_content_loss_kernel(
        tile_rows, slab_rows, rows, num_blocks, need_mask
    )

    partials = pl.pallas_call(
        kernel,
        out_shape=jax.ShapeDtypeStruct((num_blocks, _SUBLANE, _LANE), jnp.float32),
        grid=(num_blocks,),
        in_specs=[
            pl.BlockSpec((tile_rows, _LANE), lambda i: (i, 0)),
            pl.BlockSpec((tile_rows, _LANE), lambda i: (i, 0)),
        ],
        out_specs=pl.BlockSpec((1, _SUBLANE, _LANE), lambda i: (i, 0, 0)),
        compiler_params=pltpu.CompilerParams(
            dimension_semantics=("parallel",),
            # 16 MiB of double-buffered input windows at the default tile needs
            # more than v5e's 16 MiB scoped default; 32 MiB fits every gen
            # (v7x physical VMEM is 64 MiB per TensorCore).
            vmem_limit_bytes=32 << 20,
        ),
        cost_estimate=pl.CostEstimate(
            flops=3 * total,
            transcendentals=0,
            bytes_accessed=2 * total * itemsize,
        ),
    )(x2, t2)

    loss = jnp.sum(partials) / jnp.float32(total)
    # The PyTorch module returns its input unchanged; passthrough is free here.
    return x, loss


if __name__ == "__main__":
    key = jax.random.PRNGKey(0)
    k_x, k_t = jax.random.split(key)

    # Small NCHW shapes consistent with a conv feature map.
    x = jax.random.normal(k_x, (2, 4, 16, 16), dtype=jnp.float32)
    target = jax.random.normal(k_t, (2, 4, 16, 16), dtype=jnp.float32)

    y, loss = content_loss(x, target)
    y = jax.block_until_ready(y)
    loss = jax.block_until_ready(loss)

    ref_loss = jnp.mean((x - target) ** 2)
    assert jnp.allclose(loss, ref_loss, rtol=1e-5, atol=1e-6), (loss, ref_loss)
    assert jnp.array_equal(y, x)

    # Ragged size (507 elems): exercises the zero-pad path.
    xr = jax.random.normal(k_x, (1, 3, 13, 13), dtype=jnp.float32)
    tr = jax.random.normal(k_t, (1, 3, 13, 13), dtype=jnp.float32)
    _, loss_r = content_loss(xr, tr)
    loss_r = jax.block_until_ready(loss_r)
    assert jnp.allclose(loss_r, jnp.mean((xr - tr) ** 2), rtol=1e-5, atol=1e-6)

    # rows (24) not a multiple of tile_rows (16): exercises the pl.when-gated
    # mask on the final partial grid block.
    xm = jax.random.normal(k_x, (2, 3, 16, 32), dtype=jnp.float32)
    tm = jax.random.normal(k_t, (2, 3, 16, 32), dtype=jnp.float32)
    _, loss_m = content_loss(xm, tm, max_tile_rows=16)
    loss_m = jax.block_until_ready(loss_m)
    assert jnp.allclose(loss_m, jnp.mean((xm - tm) ** 2), rtol=1e-5, atol=1e-6)

    # Larger-but-still-small case (rows=512): exercises the slab fori_loop path.
    xl = jax.random.normal(k_x, (4, 16, 32, 32), dtype=jnp.float32)
    tl = jax.random.normal(k_t, (4, 16, 32, 32), dtype=jnp.float32)
    _, loss_l = content_loss(xl, tl)
    loss_l = jax.block_until_ready(loss_l)
    assert jnp.allclose(loss_l, jnp.mean((xl - tl) ** 2), rtol=1e-5, atol=1e-6)

    # bf16 inputs: exercises the dtype-aware sublane pack (16) + f32 upcast.
    xb = jax.random.normal(k_x, (2, 4, 16, 16), dtype=jnp.bfloat16)
    tb = jax.random.normal(k_t, (2, 4, 16, 16), dtype=jnp.bfloat16)
    _, loss_b = content_loss(xb, tb)
    loss_b = jax.block_until_ready(loss_b)
    ref_b = jnp.mean((xb.astype(jnp.float32) - tb.astype(jnp.float32)) ** 2)
    assert jnp.allclose(loss_b, ref_b, rtol=1e-4, atol=1e-5), (loss_b, ref_b)

    print("KERNEL_OK")
</pallas_src>

<mosaic_0001>
module attributes {stable_mosaic.version = 11 : i64} {
  func.func @kernel(%arg0: i32, %arg1: memref<16x128xf32, #tpu.memory_space<vmem>>, %arg2: memref<16x128xf32, #tpu.memory_space<vmem>>, %arg3: memref<1x8x128xf32, #tpu.memory_space<vmem>>) attributes {dimension_semantics = [#tpu.dimension_semantics<parallel>], iteration_bounds = array<i64: 1>, scalar_prefetch = 0 : i64, scratch_operands = 0 : i64, tpu.core_type = #tpu.core_type<tc>, window_params = [{transform_indices = @transform_0, window_bounds = array<i64: 16, 128>}, {transform_indices = @transform_1, window_bounds = array<i64: 16, 128>}, {transform_indices = @transform_2, window_bounds = array<i64: 1, 8, 128>}]} {
    %c0 = arith.constant 0 : index
    %c0_0 = arith.constant 0 : index
    %0 = vector.load %arg1[%c0, %c0_0] : memref<16x128xf32, #tpu.memory_space<vmem>>, vector<16x128xf32>
    %c0_1 = arith.constant 0 : index
    %c0_2 = arith.constant 0 : index
    %1 = vector.load %arg2[%c0_1, %c0_2] : memref<16x128xf32, #tpu.memory_space<vmem>>, vector<16x128xf32>
    %2 = arith.subf %0, %1 : vector<16x128xf32>
    %3 = arith.mulf %2, %2 : vector<16x128xf32>
    %4 = vector.shape_cast %3 : vector<16x128xf32> to vector<2x8x128xf32>
    %cst = arith.constant dense<0.000000e+00> : vector<8x128xf32>
    %5 = vector.multi_reduction <add>, %4, %cst [0] : vector<2x8x128xf32> to vector<8x128xf32>
    %c0_3 = arith.constant 0 : index
    %c0_4 = arith.constant 0 : index
    %c0_5 = arith.constant 0 : index
    %6 = vector.load %arg3[%c0_3, %c0_4, %c0_5] : memref<1x8x128xf32, #tpu.memory_space<vmem>>, vector<1x8x128xf32>
    %7 = vector.shape_cast %6 : vector<1x8x128xf32> to vector<8x128xf32>
    %8 = vector.shape_cast %5 : vector<8x128xf32> to vector<1x8x128xf32>
    tpu.vector_store %arg3[%c0_3, %c0_4, %c0_5], %8 {strides = array<i32>} : memref<1x8x128xf32, #tpu.memory_space<vmem>>, vector<1x8x128xf32>,
    return
  }
  func.func @transform_0(%arg0: i32) -> (i32, i32) {
    %c0_i32 = arith.constant 0 : i32
    %c0_i32_0 = arith.constant 0 : i32
    return %arg0, %c0_i32 : i32, i32
  }
  func.func @transform_1(%arg0: i32) -> (i32, i32) {
    %c0_i32 = arith.constant 0 : i32
    %c0_i32_0 = arith.constant 0 : i32
    return %arg0, %c0_i32 : i32, i32
  }
  func.func @transform_2(%arg0: i32) -> (i32, i32, i32) {
    %c0_i32 = arith.constant 0 : i32
    %c0_i32_0 = arith.constant 0 : i32
    %c0_i32_1 = arith.constant 0 : i32
    return %arg0, %c0_i32, %c0_i32_0 : i32, i32, i32
  }
}

</mosaic_0001>

<llo_original>
// kernel: tpu_custom_call.1
$region0: #{tpu_custom_call.1}
  #allocation0 [shape = 'u32[]', space=smem, size = 0x4, offset = 0x4, fixed_abs, tag = 'smem constant byte address 0x4 - core index']
  #allocation1 [shape = 'u32[144,128]{1,0:T(1,128)}', space=vmem, size = 0x12000, scoped, tag = 'internal scratch']
  %s0 = inlined_call_operand.hbm [shape: f32[16,128], index: 0, kind: input, shape index: {}]
  %s1 = inlined_call_operand.hbm [shape: f32[16,128], index: 1, kind: input, shape index: {}]
  %s2 = inlined_call_operand.hbm [shape: f32[1,8,128], index: 2, kind: output, shape index: {}]
  %s3 = sld [smem:[#allocation0]]
  $region26: #{tpu_custom_call.1} parent=0
    _
  %s5 = ssub.s32 1, %s3
  %s6 = scalar_select 0, %s5, %s3
  $region1: #{tpu_custom_call.1} parent=0
    #allocation2 [shape = 'u8[8192]{0}', space=vmem, size = 0x2000, scoped, tag = 'input window, operand 0, single buffered']
    #allocation3 [shape = 's32[1]{0}', space=sflag, size = 0x4, scoped, tag = 'scoped memory for tpu_custom_call.1']
    #allocation4 [shape = 's32[1]{0}', space=sflag, size = 0x4, scoped, tag = 'scoped memory for tpu_custom_call.1']
    #allocation5 [shape = 'u8[8192]{0}', space=vmem, size = 0x2000, scoped, tag = 'input window, operand 1, single buffered']
    #allocation6 [shape = 's32[1]{0}', space=sflag, size = 0x4, scoped, tag = 'scoped memory for tpu_custom_call.1']
    #allocation7 [shape = 'u8[4096]{0}', space=vmem, size = 0x1000, scoped, tag = 'output window, operand 0, single buffered']
    %7 = vsyncpa [#allocation3], 0
    %8 = vsyncpa [#allocation6], 0
    %9 = vsyncpa [#allocation4], 0
    // Predicated region
    $region2: #{tpu_custom_call.1} parent=1 // pred_check
      _
    $region3: #{tpu_custom_call.1} parent=1 // pred_check_branch
      %11 = sbr.rel (0) target = $region5
    $region4: #{tpu_custom_call.1} parent=1 // pred_region
      %s13 = ssub.s32 256, 256
      %14 = vsyncadd [#allocation3], %s13
      %s15 = sshll.u32 [#allocation2], 4
      %s16 = int_to_ptr.vmem [resolvable:$true] %s15
      %21 = dma.hbm_to_vmem [thread:$0]  %s0, 256, %s16, [#allocation3], 128, 128, 8
    $region5: #{tpu_custom_call.1} parent=1 // pred_fallthru
      _
    // Predicated region
    $region6: #{tpu_custom_call.1} parent=1 // pred_check
      _
    $region7: #{tpu_custom_call.1} parent=1 // pred_check_branch
      %23 = sbr.rel (0) target = $region9
    $region8: #{tpu_custom_call.1} parent=1 // pred_region
      %s25 = ssub.s32 256, 256
      %26 = vsyncadd [#allocation6], %s25
      %s27 = sshll.u32 [#allocation5], 4
      %s28 = int_to_ptr.vmem [resolvable:$true] %s27
      %33 = dma.hbm_to_vmem [thread:$0]  %s1, 256, %s28, [#allocation6], 128, 128, 8
    $region9: #{tpu_custom_call.1} parent=1 // pred_fallthru
      _
    // Predicated region
    $region10: #{tpu_custom_call.1} parent=1 // pred_check
      _
    $region11: #{tpu_custom_call.1} parent=1 // pred_check_branch
      %35 = sbr.rel (0) target = $region13
    $region12: #{tpu_custom_call.1} parent=1 // pred_region
      %36 = dma.done [#allocation3], 256
    $region13: #{tpu_custom_call.1} parent=1 // pred_fallthru
      _
    // Predicated region
    $region14: #{tpu_custom_call.1} parent=1 // pred_check
      _
    $region15: #{tpu_custom_call.1} parent=1 // pred_check_branch
      %38 = sbr.rel (0) target = $region17
    $region16: #{tpu_custom_call.1} parent=1 // pred_region
      %39 = dma.done [#allocation6], 256
    $region17: #{tpu_custom_call.1} parent=1 // pred_fallthru
      _
    %v40 = vld [vmem:[#allocation2] sm:$0xff]
    %v41 = vld [vmem:[#allocation2 + $0x8] sm:$0xff]
    %v42 = vld [vmem:[#allocation5] sm:$0xff]
    %v43 = vld [vmem:[#allocation5 + $0x8] sm:$0xff]
    %v44 = vsub.f32 %v40, %v42
    %v45 = vsub.f32 %v41, %v43
    %v46 = vmul.f32 %v44, %v44
    %v47 = vmul.f32 %v45, %v45
    %v48 = vadd.f32 %v46, %v47
    %49 = vst [vmem:[#allocation7] sm:$0xff] %v48
    // Predicated region
    $region18: #{tpu_custom_call.1} parent=1 // pred_check
      _
    $region19: #{tpu_custom_call.1} parent=1 // pred_check_branch
      %51 = sbr.rel (0) target = $region21
    $region20: #{tpu_custom_call.1} parent=1 // pred_region
      %s53 = ssub.s32 128, 128
      %54 = vsyncadd [#allocation4], %s53
      %s56 = sshll.u32 [#allocation7], 4
      %s57 = int_to_ptr.vmem [resolvable:$true] %s56
      %59 = dma.vmem_to_hbm [thread:$0]  %s57, 128, %s2, [#allocation4]
    $region21: #{tpu_custom_call.1} parent=1 // pred_fallthru
      _
    // Predicated region
    $region22: #{tpu_custom_call.1} parent=1 // pred_check
      _
    $region23: #{tpu_custom_call.1} parent=1 // pred_check_branch
      %61 = sbr.rel (0) target = $region25
    $region24: #{tpu_custom_call.1} parent=1 // pred_region
      %62 = dma.done [#allocation4], 128
    $region25: #{tpu_custom_call.1} parent=1 // pred_fallthru
      _
    %63 = vsyncpa [#allocation3], 1
    %64 = vsyncpa [#allocation6], 1
    %65 = vsyncpa [#allocation4], 1

</llo_original>
